<compile_context>
chip_gen: v7x
topology: tpu7x:2x2x1
jax: 0.10.0
libtpu: 0.0.40
codegen_flags: <defaults>
</compile_context>

<pallas_src>
import functools

import jax
import jax.numpy as jnp
import numpy as np
from jax.experimental import pallas as pl
from jax.experimental.pallas import tpu as pltpu

_EPS = 1e-6
_LANES = 128
_ST_ALIGN = 32                         # satisfies f32 (8,128) and int8 (32,128) tiling
_ST_MAX = 2048
_CHUNK_ROWS = 8                        # strip-mine granularity (one f32 vreg of sublanes)
_BLOCK_BYTES_TARGET = 4 * 1024 * 1024  # ~4 MiB of logits per grid step (v5e..v7x safe)


def _dice_kernel(pred_ref, tgt_ref, inter_ref, psum_ref,
                 inter_acc, psum_acc, *,
                 st, acc_rows, hw, kj, k_tiles, needs_mask):
    """One (batch, spatial-split, spatial-tile) grid step.

    pred_ref : (1, C, st, 128)  logits in their original dtype (f32 / bf16)
    tgt_ref  : (1, 1, st, 128)  int8/int32 class ids (pad rows/lanes == C)
    inter_ref, psum_ref : (1, 1, C, 1) f32 per-class partial sums (written once)
    inter_acc, psum_acc : (C, acc_rows, 128) f32 VMEM accumulators
    """
    j = pl.program_id(1)
    k = pl.program_id(2)

    @pl.when(k == 0)
    def _init():
        inter_acc[...] = jnp.zeros_like(inter_acc)
        psum_acc[...] = jnp.zeros_like(psum_acc)

    g = j * kj + k           # global spatial tile index
    row0 = g * st            # first (S,128)-row covered by this tile

    def chunk(r0, rows, masked):
        # Per-chunk math stays in vregs; only the accumulator add touches VMEM.
        logits = pred_ref[0, :, pl.ds(r0, rows), :].astype(jnp.float32)  # (C,rows,128)
        tgt = tgt_ref[0, 0, pl.ds(r0, rows), :].astype(jnp.int32)        # (rows,128)

        # Softmax over the class axis.  C is a leading slab axis so max/sum
        # over it are plain VPU ops; the reciprocal runs on the EUP.
        m = jnp.max(logits, axis=0)                     # (rows,128)
        e = jnp.exp(logits - m[None])                   # (C,rows,128)
        z = jnp.sum(e, axis=0)                          # (rows,128)
        inv = pl.reciprocal(z, approx=True)
        inv = inv * (2.0 - z * inv)                     # Newton step -> ~f32 1/z
        probs = e * inv[None]                           # (C,rows,128)

        cls = jax.lax.broadcasted_iota(jnp.int32, probs.shape, 0)
        hit = tgt[None] == cls                          # bool one-hot, no f32 temp

        if masked:
            # Only emitted for the single ragged last tile: drop padded /
            # out-of-bounds pixels (their logits are garbage from the clamped
            # DMA; the padded target already maps them to class id C).
            row = jax.lax.broadcasted_iota(jnp.int32, (rows, _LANES), 0)
            lane = jax.lax.broadcasted_iota(jnp.int32, (rows, _LANES), 1)
            flat = (row0 + r0 + row) * _LANES + lane
            p_for_sum = jnp.where((flat < hw)[None], probs, 0.0)
        else:
            p_for_sum = probs

        inter_acc[:, :rows, :] += jnp.where(hit, probs, 0.0)
        psum_acc[:, :rows, :] += p_for_sum

    n_full = st // _CHUNK_ROWS
    tail = st - n_full * _CHUNK_ROWS

    def run(masked):
        if n_full > 0:
            def body(i, carry):
                chunk(pl.multiple_of(i * _CHUNK_ROWS, _CHUNK_ROWS),
                      _CHUNK_ROWS, masked)
                return carry
            jax.lax.fori_loop(0, n_full, body, 0,
                              unroll=True if n_full <= 8 else 4)
        if tail:
            chunk(n_full * _CHUNK_ROWS, tail, masked)

    if not needs_mask:
        run(False)
    elif k_tiles == 1:
        run(True)
    else:
        @pl.when(g < k_tiles - 1)
        def _fast():
            run(False)

        @pl.when(g == k_tiles - 1)
        def _masked():
            run(True)

    @pl.when(k == kj - 1)
    def _finalize():
        inter = jnp.sum(jnp.sum(inter_acc[...], axis=1), axis=1, keepdims=True)  # (C,1)
        psum = jnp.sum(jnp.sum(psum_acc[...], axis=1), axis=1, keepdims=True)    # (C,1)
        inter_ref[...] = inter[None, None]          # (1,1,C,1)
        psum_ref[...] = psum[None, None]


@functools.partial(jax.jit, static_argnames=("num_classes", "ignore_idx"))
def dice_loss_pallas(pred_nchw, target_nhw, *, num_classes, ignore_idx=None):
    """Multi-class (num_classes > 2) softmax dice loss, matching the reference."""
    # TODO(synk): num_classes == 1 / == 2 branches of the reference (raw /
    #             sigmoid binary dice) are not implemented.
    B, C, H, W = pred_nchw.shape
    assert C == num_classes and num_classes > 2
    assert pred_nchw.shape[0] == target_nhw.shape[0]
    HW = H * W

    # ---- spatial relayout / tile selection (no copy of the logits) ---------
    s_raw = -(-HW // _LANES)                 # rows of the (S,128) layout
    lane_pad = s_raw * _LANES - HW

    itemsize = int(np.dtype(pred_nchw.dtype).itemsize)
    st_budget = _BLOCK_BYTES_TARGET // (C * _LANES * itemsize)
    st_budget = max(_ST_ALIGN, min(_ST_MAX, (st_budget // _ST_ALIGN) * _ST_ALIGN))
    if s_raw <= st_budget:
        st, k_tiles = s_raw, 1               # single full-extent spatial tile
    else:
        st = st_budget                       # multiple of 32 -> valid f32/int8 block
        k_tiles = -(-s_raw // st)            # last tile may be ragged (masked in-kernel)
    row_pad = k_tiles * st - s_raw
    needs_mask = (row_pad > 0) or (lane_pad > 0)

    # v7x: keep both TensorCores busy when B == 1 by splitting the spatial
    # tiles over a second "parallel" grid axis (clean even split only).
    # TODO(synk): odd k_tiles with B == 1 still runs on one core.
    n_par = 2 if (B == 1 and k_tiles >= 2 and k_tiles % 2 == 0) else 1
    kj = k_tiles // n_par

    if lane_pad == 0:
        pred = pred_nchw.reshape(B, C, s_raw, _LANES)   # free reshape, no cast/pad
    else:
        # TODO(synk): H*W not a multiple of 128 forces one host-side pad copy
        #             of the logits (rare for segmentation shapes).
        pred = jnp.pad(pred_nchw.reshape(B, C, HW),
                       ((0, 0), (0, 0), (0, lane_pad)))
        pred = pred.reshape(B, C, s_raw, _LANES)

    # ---- target: counts in glue, sanitize + pad the tiny int tensor --------
    t32 = target_nhw.reshape(B, HW).astype(jnp.int32)
    # per-class pixel counts ("target sum") depend only on the target, so they
    # are computed once here instead of per element in the hot kernel loop.
    tsum = jnp.sum((t32[:, None, :] ==
                    jnp.arange(num_classes, dtype=jnp.int32)[None, :, None]
                    ).astype(jnp.float32), axis=-1)                      # (B, C)
    # out-of-range labels (e.g. 255 ignore pixels) -> "no class" id C so the
    # int8 kernel path can never alias a valid class after the cast.
    t_k = jnp.where((t32 >= 0) & (t32 < num_classes), t32, num_classes)
    if lane_pad:
        t_k = jnp.pad(t_k, ((0, 0), (0, lane_pad)), constant_values=num_classes)
    t_k = t_k.reshape(B, 1, s_raw, _LANES)
    if row_pad:
        t_k = jnp.pad(t_k, ((0, 0), (0, 0), (0, row_pad), (0, 0)),
                      constant_values=num_classes)
    tgt_dtype = jnp.int8 if num_classes < 127 else jnp.int32
    t_k = t_k.astype(tgt_dtype)

    # ---- pallas call --------------------------------------------------------
    acc_rows = min(_CHUNK_ROWS, st)
    kernel = functools.partial(_dice_kernel, st=st, acc_rows=acc_rows, hw=HW,
                               kj=kj, k_tiles=k_tiles, needs_mask=needs_mask)

    pred_blk = C * st * _LANES * itemsize
    tgt_blk = st * _LANES * int(np.dtype(tgt_dtype).itemsize)
    scratch = 2 * C * acc_rows * _LANES * 4
    vmem_need = 2 * pred_blk + 2 * tgt_blk + scratch
    vmem_limit = int(min(48 * 2 ** 20, max(vmem_need + 8 * 2 ** 20, 16 * 2 ** 20)))

    cost = pl.CostEstimate(
        flops=8 * B * C * HW,
        transcendentals=B * C * HW,
        bytes_accessed=B * C * HW * itemsize
        + B * k_tiles * st * _LANES * int(np.dtype(tgt_dtype).itemsize)
        + 2 * B * n_par * C * 4,
    )

    inter, psum = pl.pallas_call(
        kernel,
        out_shape=(jax.ShapeDtypeStruct((B, n_par, C, 1), jnp.float32),
                   jax.ShapeDtypeStruct((B, n_par, C, 1), jnp.float32)),
        grid=(B, n_par, kj),
        in_specs=[
            pl.BlockSpec((1, C, st, _LANES), lambda b, j, k: (b, 0, j * kj + k, 0)),
            pl.BlockSpec((1, 1, st, _LANES), lambda b, j, k: (b, 0, j * kj + k, 0)),
        ],
        out_specs=(
            pl.BlockSpec((1, 1, C, 1), lambda b, j, k: (b, j, 0, 0)),
            pl.BlockSpec((1, 1, C, 1), lambda b, j, k: (b, j, 0, 0)),
        ),
        scratch_shapes=[
            pltpu.VMEM((C, acc_rows, _LANES), jnp.float32),   # inter accumulator
            pltpu.VMEM((C, acc_rows, _LANES), jnp.float32),   # prob-sum accumulator
        ],
        compiler_params=pltpu.CompilerParams(
            dimension_semantics=("parallel", "parallel", "arbitrary"),
            vmem_limit_bytes=vmem_limit,
        ),
        cost_estimate=cost,
    )(pred, t_k)

    # ---- glue: dice ratio + batch/class combine (tiny) ----------------------
    inter_bc = jnp.sum(inter[..., 0], axis=1)     # (B, C): fold the j split
    psum_bc = jnp.sum(psum[..., 0], axis=1)       # (B, C)
    dice_bc = (2.0 * inter_bc + _EPS) / (psum_bc + tsum + _EPS)
    per_class = jnp.mean(dice_bc, axis=0)         # inner "/ pred.shape[0]"
    if ignore_idx is not None:
        keep = jnp.arange(num_classes) != ignore_idx
        dice = jnp.sum(jnp.where(keep, per_class, 0.0))
    else:
        dice = jnp.sum(per_class)
    return 1.0 - dice / num_classes               # outer "/ num_classes"


def _dice_loss_ref(pred_nchw, target_nhw, num_classes, ignore_idx=None):
    """Pure-JAX reference mirroring the PyTorch code (multi-class branch)."""
    probs = jax.nn.softmax(pred_nchw.astype(jnp.float32), axis=1)
    B = pred_nchw.shape[0]
    dice = 0.0
    for c in range(num_classes):
        if c == ignore_idx:
            continue
        d = 0.0
        for b in range(B):
            p1d = probs[b, c].reshape(-1)
            t1d = (target_nhw[b] == c).astype(jnp.float32).reshape(-1)
            inter = jnp.sum(p1d * t1d)
            sum_sets = jnp.sum(p1d) + jnp.sum(t1d)
            d = d + (2.0 * inter + _EPS) / (sum_sets + _EPS)
        dice = dice + d / B
    return 1.0 - dice / num_classes


if __name__ == "__main__":
    B, C, H, W = 2, 4, 16, 16
    num_classes = C
    ignore_idx = None

    key = jax.random.PRNGKey(0)
    k_pred, k_tgt = jax.random.split(key)
    pred = jax.random.normal(k_pred, (B, C, H, W), dtype=jnp.float32)
    target = jax.random.randint(k_tgt, (B, H, W), 0, num_classes, dtype=jnp.int32)

    loss = dice_loss_pallas(pred, target,
                            num_classes=num_classes, ignore_idx=ignore_idx)
    loss = jax.block_until_ready(loss)

    ref = _dice_loss_ref(pred, target, num_classes, ignore_idx)
    # Newton-refined reciprocal restores ~f32 accuracy -> tight tolerance again.
    np.testing.assert_allclose(np.asarray(loss), np.asarray(ref),
                               rtol=1e-4, atol=1e-4)
    print("KERNEL_OK")
</pallas_src>

<mosaic_0001>
module attributes {stable_mosaic.version = 11 : i64} {
  func.func @_dice_kernel(%arg0: i32, %arg1: i32, %arg2: i32, %arg3: memref<1x4x2x128xf32, #tpu.memory_space<vmem>>, %arg4: memref<1x1x2x128xi8, #tpu.memory_space<vmem>>, %arg5: memref<1x1x4x1xf32, #tpu.memory_space<vmem>>, %arg6: memref<1x1x4x1xf32, #tpu.memory_space<vmem>>, %arg7: memref<4x2x128xf32, #tpu.memory_space<vmem>>, %arg8: memref<4x2x128xf32, #tpu.memory_space<vmem>>) attributes {dimension_semantics = [#tpu.dimension_semantics<parallel>, #tpu.dimension_semantics<parallel>, #tpu.dimension_semantics<arbitrary>], iteration_bounds = array<i64: 2, 1, 1>, scalar_prefetch = 0 : i64, scratch_operands = 2 : i64, tpu.core_type = #tpu.core_type<tc>, window_params = [{transform_indices = @transform_0, window_bounds = array<i64: 1, 4, 2, 128>}, {transform_indices = @transform_1, window_bounds = array<i64: 1, 1, 2, 128>}, {transform_indices = @transform_2, window_bounds = array<i64: 1, 1, 4, 1>}, {transform_indices = @transform_3, window_bounds = array<i64: 1, 1, 4, 1>}]} {
    %c0_i32 = arith.constant 0 : i32
    %0 = arith.cmpi eq, %arg2, %c0_i32 : i32
    %1 = arith.extui %0 : i1 to i32
    %c0_i32_0 = arith.constant 0 : i32
    %2 = arith.cmpi ne, %1, %c0_i32_0 : i32
    scf.if %2 {
      %cst_25 = arith.constant 0.000000e+00 : f32
      %37 = vector.broadcast %cst_25 : f32 to vector<4x2x128xf32>
      %c0_26 = arith.constant 0 : index
      %c0_27 = arith.constant 0 : index
      %c0_28 = arith.constant 0 : index
      %38 = vector.load %arg7[%c0_26, %c0_27, %c0_28] : memref<4x2x128xf32, #tpu.memory_space<vmem>>, vector<4x2x128xf32>
      tpu.vector_store %arg7[%c0_26, %c0_27, %c0_28], %37 {strides = array<i32>} : memref<4x2x128xf32, #tpu.memory_space<vmem>>, vector<4x2x128xf32>,
      %cst_29 = arith.constant 0.000000e+00 : f32
      %39 = vector.broadcast %cst_29 : f32 to vector<4x2x128xf32>
      %c0_30 = arith.constant 0 : index
      %c0_31 = arith.constant 0 : index
      %c0_32 = arith.constant 0 : index
      %40 = vector.load %arg8[%c0_30, %c0_31, %c0_32] : memref<4x2x128xf32, #tpu.memory_space<vmem>>, vector<4x2x128xf32>
      tpu.vector_store %arg8[%c0_30, %c0_31, %c0_32], %39 {strides = array<i32>} : memref<4x2x128xf32, #tpu.memory_space<vmem>>, vector<4x2x128xf32>,
    } else {
    }
    %c0 = arith.constant 0 : index
    %c0_1 = arith.constant 0 : index
    %c0_2 = arith.constant 0 : index
    %c0_3 = arith.constant 0 : index
    %3 = vector.load %arg3[%c0, %c0_1, %c0_2, %c0_3] : memref<1x4x2x128xf32, #tpu.memory_space<vmem>>, vector<1x4x2x128xf32>
    %4 = vector.shape_cast %3 : vector<1x4x2x128xf32> to vector<4x2x128xf32>
    %c0_4 = arith.constant 0 : index
    %c0_5 = arith.constant 0 : index
    %c0_6 = arith.constant 0 : index
    %c0_7 = arith.constant 0 : index
    %5 = vector.load %arg4[%c0_4, %c0_5, %c0_6, %c0_7] : memref<1x1x2x128xi8, #tpu.memory_space<vmem>>, vector<1x1x2x128xi8>
    %6 = vector.shape_cast %5 : vector<1x1x2x128xi8> to vector<2x128xi8>
    %7 = arith.extsi %6 : vector<2x128xi8> to vector<2x128xi32>
    %cst = arith.constant dense<0xFF800000> : vector<2x128xf32>
    %8 = vector.multi_reduction <maximumf>, %4, %cst [0] : vector<4x2x128xf32> to vector<2x128xf32>
    %9 = vector.shape_cast %8 : vector<2x128xf32> to vector<1x2x128xf32>
    %10 = vector.broadcast %9 : vector<1x2x128xf32> to vector<4x2x128xf32>
    %11 = arith.subf %4, %10 : vector<4x2x128xf32>
    %12 = math.exp %11 : vector<4x2x128xf32>
    %cst_8 = arith.constant dense<0.000000e+00> : vector<2x128xf32>
    %13 = vector.multi_reduction <add>, %12, %cst_8 [0] : vector<4x2x128xf32> to vector<2x128xf32>
    %14 = tpu.reciprocal %13 {approx = true} : vector<2x128xf32> -> vector<2x128xf32>
    %15 = arith.mulf %13, %14 : vector<2x128xf32>
    %cst_9 = arith.constant 2.000000e+00 : f32
    %16 = vector.broadcast %cst_9 : f32 to vector<2x128xf32>
    %17 = arith.subf %16, %15 : vector<2x128xf32>
    %18 = arith.mulf %14, %17 : vector<2x128xf32>
    %19 = vector.shape_cast %18 : vector<2x128xf32> to vector<1x2x128xf32>
    %20 = vector.broadcast %19 : vector<1x2x128xf32> to vector<4x2x128xf32>
    %21 = arith.mulf %12, %20 : vector<4x2x128xf32>
    %22 = tpu.iota {dimensions = array<i32: 0>} : vector<4x2x128xi32>
    %23 = vector.shape_cast %7 : vector<2x128xi32> to vector<1x2x128xi32>
    %24 = vector.broadcast %23 : vector<1x2x128xi32> to vector<4x2x128xi32>
    %25 = arith.cmpi eq, %24, %22 : vector<4x2x128xi32>
    %c0_10 = arith.constant 0 : index
    %c0_11 = arith.constant 0 : index
    %c0_12 = arith.constant 0 : index
    %26 = vector.load %arg7[%c0_10, %c0_11, %c0_12] : memref<4x2x128xf32, #tpu.memory_space<vmem>>, vector<4x2x128xf32>
    %cst_13 = arith.constant 0.000000e+00 : f32
    %27 = vector.broadcast %cst_13 : f32 to vector<4x2x128xf32>
    %28 = arith.select %25, %21, %27 : vector<4x2x128xi1>, vector<4x2x128xf32>
    %29 = arith.addf %26, %28 : vector<4x2x128xf32>
    %c0_14 = arith.constant 0 : index
    %c0_15 = arith.constant 0 : index
    %c0_16 = arith.constant 0 : index
    %30 = vector.load %arg7[%c0_14, %c0_15, %c0_16] : memref<4x2x128xf32, #tpu.memory_space<vmem>>, vector<4x2x128xf32>
    tpu.vector_store %arg7[%c0_14, %c0_15, %c0_16], %29 {strides = array<i32>} : memref<4x2x128xf32, #tpu.memory_space<vmem>>, vector<4x2x128xf32>,
    %c0_17 = arith.constant 0 : index
    %c0_18 = arith.constant 0 : index
    %c0_19 = arith.constant 0 : index
    %31 = vector.load %arg8[%c0_17, %c0_18, %c0_19] : memref<4x2x128xf32, #tpu.memory_space<vmem>>, vector<4x2x128xf32>
    %32 = arith.addf %31, %21 : vector<4x2x128xf32>
    %c0_20 = arith.constant 0 : index
    %c0_21 = arith.constant 0 : index
    %c0_22 = arith.constant 0 : index
    %33 = vector.load %arg8[%c0_20, %c0_21, %c0_22] : memref<4x2x128xf32, #tpu.memory_space<vmem>>, vector<4x2x128xf32>
    tpu.vector_store %arg8[%c0_20, %c0_21, %c0_22], %32 {strides = array<i32>} : memref<4x2x128xf32, #tpu.memory_space<vmem>>, vector<4x2x128xf32>,
    %c0_i32_23 = arith.constant 0 : i32
    %34 = arith.cmpi eq, %arg2, %c0_i32_23 : i32
    %35 = arith.extui %34 : i1 to i32
    %c0_i32_24 = arith.constant 0 : i32
    %36 = arith.cmpi ne, %35, %c0_i32_24 : i32
    scf.if %36 {
      %c0_25 = arith.constant 0 : index
      %c0_26 = arith.constant 0 : index
      %c0_27 = arith.constant 0 : index
      %37 = vector.load %arg7[%c0_25, %c0_26, %c0_27] : memref<4x2x128xf32, #tpu.memory_space<vmem>>, vector<4x2x128xf32>
      %cst_28 = arith.constant dense<0.000000e+00> : vector<4x128xf32>
      %38 = vector.multi_reduction <add>, %37, %cst_28 [1] : vector<4x2x128xf32> to vector<4x128xf32>
      %cst_29 = arith.constant dense<0.000000e+00> : vector<4xf32>
      %39 = vector.multi_reduction <add>, %38, %cst_29 [1] : vector<4x128xf32> to vector<4xf32>
      %40 = vector.shape_cast %39 : vector<4xf32> to vector<4x1xf32>
      %c0_30 = arith.constant 0 : index
      %c0_31 = arith.constant 0 : index
      %c0_32 = arith.constant 0 : index
      %41 = vector.load %arg8[%c0_30, %c0_31, %c0_32] : memref<4x2x128xf32, #tpu.memory_space<vmem>>, vector<4x2x128xf32>
      %cst_33 = arith.constant dense<0.000000e+00> : vector<4x128xf32>
      %42 = vector.multi_reduction <add>, %41, %cst_33 [1] : vector<4x2x128xf32> to vector<4x128xf32>
      %cst_34 = arith.constant dense<0.000000e+00> : vector<4xf32>
      %43 = vector.multi_reduction <add>, %42, %cst_34 [1] : vector<4x128xf32> to vector<4xf32>
      %44 = vector.shape_cast %43 : vector<4xf32> to vector<4x1xf32>
      %45 = vector.shape_cast %40 : vector<4x1xf32> to vector<1x1x4x1xf32>
      %c0_35 = arith.constant 0 : index
      %c0_36 = arith.constant 0 : index
      %c0_37 = arith.constant 0 : index
      %c0_38 = arith.constant 0 : index
      %46 = vector.load %arg5[%c0_35, %c0_36, %c0_37, %c0_38] : memref<1x1x4x1xf32, #tpu.memory_space<vmem>>, vector<1x1x4x1xf32>
      tpu.vector_store %arg5[%c0_35, %c0_36, %c0_37, %c0_38], %45 {strides = array<i32>} : memref<1x1x4x1xf32, #tpu.memory_space<vmem>>, vector<1x1x4x1xf32>,
      %47 = vector.shape_cast %44 : vector<4x1xf32> to vector<1x1x4x1xf32>
      %c0_39 = arith.constant 0 : index
      %c0_40 = arith.constant 0 : index
      %c0_41 = arith.constant 0 : index
      %c0_42 = arith.constant 0 : index
      %48 = vector.load %arg6[%c0_39, %c0_40, %c0_41, %c0_42] : memref<1x1x4x1xf32, #tpu.memory_space<vmem>>, vector<1x1x4x1xf32>
      tpu.vector_store %arg6[%c0_39, %c0_40, %c0_41, %c0_42], %47 {strides = array<i32>} : memref<1x1x4x1xf32, #tpu.memory_space<vmem>>, vector<1x1x4x1xf32>,
    } else {
    }
    return
  }
  func.func @transform_0(%arg0: i32, %arg1: i32, %arg2: i32) -> (i32, i32, i32, i32) {
    %c1_i32 = arith.constant 1 : i32
    %0 = arith.muli %arg1, %c1_i32 : i32
    %1 = arith.addi %0, %arg2 : i32
    %c0_i32 = arith.constant 0 : i32
    %c0_i32_0 = arith.constant 0 : i32
    %c0_i32_1 = arith.constant 0 : i32
    return %arg0, %c0_i32, %1, %c0_i32_0 : i32, i32, i32, i32
  }
  func.func @transform_1(%arg0: i32, %arg1: i32, %arg2: i32) -> (i32, i32, i32, i32) {
    %c1_i32 = arith.constant 1 : i32
    %0 = arith.muli %arg1, %c1_i32 : i32
    %1 = arith.addi %0, %arg2 : i32
    %c0_i32 = arith.constant 0 : i32
    %c0_i32_0 = arith.constant 0 : i32
    %c0_i32_1 = arith.constant 0 : i32
    return %arg0, %c0_i32, %1, %c0_i32_0 : i32, i32, i32, i32
  }
  func.func @transform_2(%arg0: i32, %arg1: i32, %arg2: i32) -> (i32, i32, i32, i32) {
    %c0_i32 = arith.constant 0 : i32
    %c0_i32_0 = arith.constant 0 : i32
    %c0_i32_1 = arith.constant 0 : i32
    return %arg0, %arg1, %c0_i32, %c0_i32_0 : i32, i32, i32, i32
  }
  func.func @transform_3(%arg0: i32, %arg1: i32, %arg2: i32) -> (i32, i32, i32, i32) {
    %c0_i32 = arith.constant 0 : i32
    %c0_i32_0 = arith.constant 0 : i32
    %c0_i32_1 = arith.constant 0 : i32
    return %arg0, %arg1, %c0_i32, %c0_i32_0 : i32, i32, i32, i32
  }
}

</mosaic_0001>

<llo_original>
// kernel: eq.8
$region0: #{eq.8}
  %s0 = inlined_call_operand.vmem [shape: s32[2,16,16], index: 0, kind: input, shape index: {}]
  %s1 = inlined_call_operand.vmem [shape: s32[2,256], index: 1, kind: output, shape index: {}]
  $region1: #{eq.8} parent=0
    #allocation0 [shape = 'u8[8192]{0}', space=vmem, size = 0x2000, scoped, tag = 'scoped mem for output reshape']
    %v2 = vld [vmem:[%s0] ss:$8 sm:$0xf]
    %vm3 = vcmask 130048
    %4 = vst.msk [vmem:[#allocation0] ss:$8 sm:$0x3] %vm3, %v2
    %s5 = scalar_lea.vmem [#allocation0], 4294967281
    %6 = vst.msk [vmem:[%s5] ss:$8 sm:$0xc] %vm3, %v2
    %s7 = scalar_lea.vmem %s0, 7
    %s8 = smov 3
    %v9 = vld [vmem:[%s7] ss:$16 sm:%s8]
    %s10 = scalar_lea.vmem %s0, 4294967279
    %s11 = smov 12
    %v12 = vld [vmem:[%s10] ss:$16 sm:%s11]
    %vm13 = vcmask 1043458
    %v14 = vsel %vm13, %v12, %v9
    %15 = vrot.lane.b32.xlu0 %v14, 112
    %v16 = vpop.permute.xlu0 %15
    %vm17 = vcmask 1048448
    %18 = vst.msk [vmem:[#allocation0] sm:$0x3] %vm17, %v16
    %s19 = scalar_lea.vmem [#allocation0], 6
    %20 = vst.msk [vmem:[%s19] sm:$0xc] %vm17, %v16
    %s21 = scalar_lea.vmem %s0, 6
    %s22 = smov 3
    %v23 = vld [vmem:[%s21] ss:$16 sm:%s22]
    %s24 = scalar_lea.vmem %s0, 4294967278
    %s25 = smov 12
    %v26 = vld [vmem:[%s24] ss:$16 sm:%s25]
    %vm27 = vcmask 1043458
    %v28 = vsel %vm27, %v26, %v23
    %29 = vrot.lane.b32.xlu0 %v28, 96
    %v30 = vpop.permute.xlu0 %29
    %vm31 = vcmask 917248
    %32 = vst.msk [vmem:[#allocation0] sm:$0x3] %vm31, %v30
    %s33 = scalar_lea.vmem [#allocation0], 6
    %34 = vst.msk [vmem:[%s33] sm:$0xc] %vm31, %v30
    %s35 = scalar_lea.vmem %s0, 5
    %s36 = smov 3
    %v37 = vld [vmem:[%s35] ss:$16 sm:%s36]
    %s38 = scalar_lea.vmem %s0, 4294967277
    %s39 = smov 12
    %v40 = vld [vmem:[%s38] ss:$16 sm:%s39]
    %vm41 = vcmask 1043458
    %v42 = vsel %vm41, %v40, %v37
    %43 = vrot.lane.b32.xlu0 %v42, 80
    %v44 = vpop.permute.xlu0 %43
    %vm45 = vcmask 786048
    %46 = vst.msk [vmem:[#allocation0] sm:$0x3] %vm45, %v44
    %s47 = scalar_lea.vmem [#allocation0], 6
    %48 = vst.msk [vmem:[%s47] sm:$0xc] %vm45, %v44
    %s49 = scalar_lea.vmem %s0, 4
    %s50 = smov 3
    %v51 = vld [vmem:[%s49] ss:$16 sm:%s50]
    %s52 = scalar_lea.vmem %s0, 4294967276
    %s53 = smov 12
    %v54 = vld [vmem:[%s52] ss:$16 sm:%s53]
    %vm55 = vcmask 1043458
    %v56 = vsel %vm55, %v54, %v51
    %57 = vrot.lane.b32.xlu0 %v56, 64
    %v58 = vpop.permute.xlu0 %57
    %vm59 = vcmask 654848
    %60 = vst.msk [vmem:[#allocation0] sm:$0x3] %vm59, %v58
    %s61 = scalar_lea.vmem [#allocation0], 6
    %62 = vst.msk [vmem:[%s61] sm:$0xc] %vm59, %v58
    %s63 = scalar_lea.vmem %s0, 3
    %s64 = smov 3
    %v65 = vld [vmem:[%s63] ss:$16 sm:%s64]
    %s66 = scalar_lea.vmem %s0, 4294967275
    %s67 = smov 12
    %v68 = vld [vmem:[%s66] ss:$16 sm:%s67]
    %vm69 = vcmask 1043458
    %v70 = vsel %vm69, %v68, %v65
    %71 = vrot.lane.b32.xlu0 %v70, 48
    %v72 = vpop.permute.xlu0 %71
    %vm73 = vcmask 523648
    %74 = vst.msk [vmem:[#allocation0] sm:$0x3] %vm73, %v72
    %s75 = scalar_lea.vmem [#allocation0], 6
    %76 = vst.msk [vmem:[%s75] sm:$0xc] %vm73, %v72
    %s77 = scalar_lea.vmem %s0, 2
    %s78 = smov 3
    %v79 = vld [vmem:[%s77] ss:$16 sm:%s78]
    %s80 = scalar_lea.vmem %s0, 4294967274
    %s81 = smov 12
    %v82 = vld [vmem:[%s80] ss:$16 sm:%s81]
    %vm83 = vcmask 1043458
    %v84 = vsel %vm83, %v82, %v79
    %85 = vrot.lane.b32.xlu0 %v84, 32
    %v86 = vpop.permute.xlu0 %85
    %vm87 = vcmask 392448
    %88 = vst.msk [vmem:[#allocation0] sm:$0x3] %vm87, %v86
    %s89 = scalar_lea.vmem [#allocation0], 6
    %90 = vst.msk [vmem:[%s89] sm:$0xc] %vm87, %v86
    %s91 = scalar_lea.vmem %s0, 1
    %s92 = smov 3
    %v93 = vld [vmem:[%s91] ss:$16 sm:%s92]
    %s94 = scalar_lea.vmem %s0, 4294967273
    %s95 = smov 12
    %v96 = vld [vmem:[%s94] ss:$16 sm:%s95]
    %vm97 = vcmask 1043458
    %v98 = vsel %vm97, %v96, %v93
    %99 = vrot.lane.b32.xlu0 %v98, 16
    %v100 = vpop.permute.xlu0 %99
    %vm101 = vcmask 261248
    %102 = vst.msk [vmem:[#allocation0] sm:$0x3] %vm101, %v100
    %s103 = scalar_lea.vmem [#allocation0], 6
    %104 = vst.msk [vmem:[%s103] sm:$0xc] %vm101, %v100
    %s106 = sshllo.u32 0, 2
    %v108 = vld [vmem:[#allocation0] sm:%s106]
    %s109 = sshllo.u32 0, 2
    %110 = vst [vmem:[%s1] sm:%s109] %v108
    %s111 = scalar_lea.vmem [#allocation0], 8
    %v112 = vld [vmem:[%s111] sm:%s106]
    %s113 = sshllo.u32 0, 2
    %s114 = scalar_lea.vmem %s1, 2
    %115 = vst [vmem:[%s114] sm:%s113] %v112

// kernel: dice_loss_pallas.1
$region0: #{dice_loss_pallas.1}
  #allocation0 [shape = 'u32[]', space=smem, size = 0x4, offset = 0x4, fixed_abs, tag = 'smem constant byte address 0x4 - core index']
  #allocation1 [shape = 'u32[144,128]{1,0:T(1,128)}', space=vmem, size = 0x12000, scoped, tag = 'internal scratch']
  #allocation2 [shape = 'f32[4,2,128]{2,1,0:T(2,128)}', space=vmem, size = 0x1000, scoped, tag = 'scratch operand']
  #allocation3 [shape = 'f32[4,2,128]{2,1,0:T(2,128)}', space=vmem, size = 0x1000, scoped, tag = 'scratch operand']
  %s0 = inlined_call_operand.vmem [shape: f32[2,4,2,128], index: 0, kind: input, shape index: {}]
  %s1 = inlined_call_operand.vmem [shape: s8[2,1,2,128], index: 1, kind: input, shape index: {}]
  %s2 = inlined_call_operand.vmem [shape: f32[2,1,4,1], index: 2, kind: output, shape index: {0}]
  %s3 = inlined_call_operand.vmem [shape: f32[2,1,4,1], index: 3, kind: output, shape index: {1}]
  %4 = xla_tuple %s2, %s3
  %s5 = sld [smem:[#allocation0]]
  $region57: #{dice_loss_pallas.1} parent=0
    _
  %s7 = ssub.s32 1, %s5
  %s8 = scalar_select 0, %s7, %s5
  loop: start=0, step=1, limit=4
  $region2: #{dice_loss_pallas.1} parent=0 // loop_pre_header
    _
  $region3: #{dice_loss_pallas.1} parent=0 // loop_header
    %s10 = sphi 0, %s14
    %p11 = scmp.ge.s32.totalorder %s10, 4
    %s17 = sphi 0, %s36
    %s18 = sphi 0, %s32
    %s19 = sphi 0, %s28
    %s20 = sphi 0, %s17
    %s21 = sphi 0, %s18
    %s22 = sphi 0, %s19
    %s23 = sphi 0, %s20
    %s24 = sphi 0, %s21
    %s25 = sphi 0, %s22
    %s43 = sphi 0, %s45
    %s46 = sphi 0, %s43
    %s47 = sphi 0, %s46
    %s63 = sphi 0, %s47
    %s73 = sphi 0, %s75
    %s76 = sphi 0, %s73
    %s77 = sphi 0, %s76
    %s93 = sphi 0, %s77
    %s101 = sphi 0, %s103
    %s104 = sphi 0, %s101
    %s105 = sphi 0, %s104
    %s121 = sphi 0, %s105
    %s129 = sphi 0, %s131
    %s132 = sphi 0, %s129
    %s133 = sphi 0, %s132
    %s149 = sphi 0, %s133
  $region4: #{dice_loss_pallas.1} parent=0 // loop_header_branch
    %13 = sbr.rel (%p11) target = $region8
  $region5: #{dice_loss_pallas.1} parent=0 // loop_body
    %s15 = ssub.s32 %s10, 1
    %s16 = ssub.s32 %s10, 2
    %s26 = sadd.s32 1, %s19
    %p27 = scmp.ge.s32.totalorder %s26, 1
    %s28 = scalar_select %p27, 0, %s26
    %s29 = sadd.s32 1, %s18
    %s30 = scalar_select %p27, %s29, %s18
    %p31 = scmp.ge.s32.totalorder %s30, 1
    %s32 = scalar_select %p31, 0, %s30
    %s33 = sadd.s32 1, %s17
    %s34 = scalar_select %p31, %s33, %s17
    %p35 = scmp.ge.s32.totalorder %s34, 2
    %s36 = scalar_select %p35, 0, %s34
    %s37 = sadd.s32 %s18, %s19
    %s38 = sadd.s32 %s32, %s28
    %s39 = ssub.s32 %s17, %s36
    %s40 = ssub.s32 %s37, %s38
    %s41 = sor.u32 %s39, %s40
    %p42 = scmp.eq.s32.totalorder %s41, 0
    %s44 = sadd.s32 %s43, 1
    %s45 = scalar_select %p42, %s43, %s44
    %p48 = pneg %p42
    %p49 = scmp.eq.s32.totalorder %s10, 1
    %p50 = por %p48, %p49
    %p51 = scmp.ne.s32.totalorder %s43, %s46
    %p52 = scmp.eq.s32.totalorder %s10, 0
    %p53 = por %p51, %p52
    %p54 = scmp.ne.s32.totalorder %s43, %s46
    %p55 = scmp.eq.s32.totalorder %s15, 1
    %p56 = por %p54, %p55
    %p57 = scmp.ne.s32.totalorder %s46, %s47
    %p58 = scmp.eq.s32.totalorder %s15, 0
    %p59 = por %p57, %p58
    %p60 = scmp.ne.s32.totalorder %s46, %s47
    %p61 = scmp.eq.s32.totalorder %s16, 1
    %p62 = por %p60, %p61
    %p64 = scmp.ne.s32.totalorder %s47, %s63
    %p65 = scmp.eq.s32.totalorder %s16, 0
    %p66 = por %p64, %p65
    %s67 = sadd.s32 %s18, %s19
    %s68 = sadd.s32 %s32, %s28
    %s69 = ssub.s32 %s17, %s36
    %s70 = ssub.s32 %s67, %s68
    %s71 = sor.u32 %s69, %s70
    %p72 = scmp.eq.s32.totalorder %s71, 0
    %s74 = sadd.s32 %s73, 1
    %s75 = scalar_select %p72, %s73, %s74
    %p78 = pneg %p72
    %p79 = scmp.eq.s32.totalorder %s10, 1
    %p80 = por %p78, %p79
    %p81 = scmp.ne.s32.totalorder %s73, %s76
    %p82 = scmp.eq.s32.totalorder %s10, 0
    %p83 = por %p81, %p82
    %p84 = scmp.ne.s32.totalorder %s73, %s76
    %p85 = scmp.eq.s32.totalorder %s15, 1
    %p86 = por %p84, %p85
    %p87 = scmp.ne.s32.totalorder %s76, %s77
    %p88 = scmp.eq.s32.totalorder %s15, 0
    %p89 = por %p87, %p88
    %p90 = scmp.ne.s32.totalorder %s76, %s77
    %p91 = scmp.eq.s32.totalorder %s16, 1
    %p92 = por %p90, %p91
    %p94 = scmp.ne.s32.totalorder %s77, %s93
    %p95 = scmp.eq.s32.totalorder %s16, 0
    %p96 = por %p94, %p95
    %s97 = ssub.s32 %s17, %s36
    %s98 = ssub.s32 %s18, %s32
    %s99 = sor.u32 %s97, %s98
    %p100 = scmp.eq.s32.totalorder %s99, 0
    %s102 = sadd.s32 %s101, 1
    %s103 = scalar_select %p100, %s101, %s102
    %p106 = pneg %p100
    %p107 = scmp.eq.s32.totalorder %s10, 1
    %p108 = por %p106, %p107
    %p109 = scmp.ne.s32.totalorder %s101, %s104
    %p110 = scmp.eq.s32.totalorder %s10, 0
    %p111 = por %p109, %p110
    %p112 = scmp.ne.s32.totalorder %s101, %s104
    %p113 = scmp.eq.s32.totalorder %s15, 1
    %p114 = por %p112, %p113
    %p115 = scmp.ne.s32.totalorder %s104, %s105
    %p116 = scmp.eq.s32.totalorder %s15, 0
    %p117 = por %p115, %p116
    %p118 = scmp.ne.s32.totalorder %s104, %s105
    %p119 = scmp.eq.s32.totalorder %s16, 1
    %p120 = por %p118, %p119
    %p122 = scmp.ne.s32.totalorder %s105, %s121
    %p123 = scmp.eq.s32.totalorder %s16, 0
    %p124 = por %p122, %p123
    %s125 = ssub.s32 %s17, %s36
    %s126 = ssub.s32 %s18, %s32
    %s127 = sor.u32 %s125, %s126
    %p128 = scmp.eq.s32.totalorder %s127, 0
    %s130 = sadd.s32 %s129, 1
    %s131 = scalar_select %p128, %s129, %s130
    %p134 = pneg %p128
    %p135 = scmp.eq.s32.totalorder %s10, 1
    %p136 = por %p134, %p135
    %p137 = scmp.ne.s32.totalorder %s129, %s132
    %p138 = scmp.eq.s32.totalorder %s10, 0
    %p139 = por %p137, %p138
    %p140 = scmp.ne.s32.totalorder %s129, %s132
    %p141 = scmp.eq.s32.totalorder %s15, 1
    %p142 = por %p140, %p141
    %p143 = scmp.ne.s32.totalorder %s132, %s133
    %p144 = scmp.eq.s32.totalorder %s15, 0
    %p145 = por %p143, %p144
    %p146 = scmp.ne.s32.totalorder %s132, %s133
    %p147 = scmp.eq.s32.totalorder %s16, 1
    %p148 = por %p146, %p147
    %p150 = scmp.ne.s32.totalorder %s133, %s149
    %p151 = scmp.eq.s32.totalorder %s16, 0
    %p152 = por %p150, %p151
    %p153 = scmp.le.s32.totalorder 1, %s10
    %p154 = scmp.lt.s32.totalorder %s10, 3
    %p155 = pnand %p153, %p154
    %p156 = pneg %p155
    // Predicated region
    $region9: #{dice_loss_pallas.1} parent=5 // pred_check
      _
    $region10: #{dice_loss_pallas.1} parent=5 // pred_check_branch
      %158 = sbr.rel (%p155) target = $region12
    $region11: #{dice_loss_pallas.1} parent=5 // pred_region
      %s159 = ssub.s32 %s10, 1
    $region12: #{dice_loss_pallas.1} parent=5 // pred_fallthru
      _
    %p160 = scmp.lt.s32.totalorder %s10, 2
    // Predicated region
    $region13: #{dice_loss_pallas.1} parent=5 // pred_check
      %p161 = pneg %p160
    $region14: #{dice_loss_pallas.1} parent=5 // pred_check_branch
      %163 = sbr.rel (%p161) target = $region16
    $region15: #{dice_loss_pallas.1} parent=5 // pred_region
      // Predicated region
      $region17: #{dice_loss_pallas.1} parent=15 // pred_check
        %p164 = pneg %p53
      $region18: #{dice_loss_pallas.1} parent=15 // pred_check_branch
        %166 = sbr.rel (%p164) target = $region20
      $region19: #{dice_loss_pallas.1} parent=15 // pred_region
        %s167 = sadd.s32 %s18, %s19
        %p168 = scmp.lt.s32.totalorder %s17, 1
        %s169 = scalar_select %p168, %s17, 1
        %p170 = scmp.lt.s32.totalorder %s167, 0
        %s171 = scalar_select %p170, %s167, 0
        %s172 = smul.addr %s169, 4
        %s173 = sadd.s32 %s171, %s172
        %s174 = smul.addr %s173, 2
        %s175 = scalar_lea.vmem %s0, %s174
        %s176 = sadd.s32 %s18, %s19
      $region20: #{dice_loss_pallas.1} parent=15 // pred_fallthru
        _
      // Predicated region
      $region21: #{dice_loss_pallas.1} parent=15 // pred_check
        %p177 = pneg %p83
      $region22: #{dice_loss_pallas.1} parent=15 // pred_check_branch
        %179 = sbr.rel (%p177) target = $region24
      $region23: #{dice_loss_pallas.1} parent=15 // pred_region
        %s180 = sadd.s32 %s18, %s19
        %p181 = scmp.lt.s32.totalorder %s17, 1
        %s182 = scalar_select %p181, %s17, 1
        %p183 = scmp.lt.s32.totalorder %s180, 0
        %s184 = scalar_select %p183, %s180, 0
        %s185 = sadd.s32 %s184, %s182
        %s186 = scalar_lea.vmem %s1, %s185
        %s187 = sadd.s32 %s18, %s19
      $region24: #{dice_loss_pallas.1} parent=15 // pred_fallthru
        _
    $region16: #{dice_loss_pallas.1} parent=5 // pred_fallthru
      _
    %p188 = scmp.le.s32.totalorder 1, %s10
    %p189 = scmp.lt.s32.totalorder %s10, 3
    %p190 = pnand %p188, %p189
    %p191 = pneg %p190
    // Predicated region
    $region25: #{dice_loss_pallas.1} parent=5 // pred_check
      _
    $region26: #{dice_loss_pallas.1} parent=5 // pred_check_branch
      %193 = sbr.rel (%p190) target = $region28
    $region27: #{dice_loss_pallas.1} parent=5 // pred_region
      %s194 = ssub.s32 %s10, 1
      %s195 = sadd.s32 %s21, %s22
      %p196 = scmp.lt.s32.totalorder %s20, 1
      %s197 = scalar_select %p196, %s20, 1
      %p198 = scmp.lt.s32.totalorder %s195, 0
      %s199 = scalar_select %p198, %s195, 0
      %s200 = smul.addr %s197, 4
      %s201 = sadd.s32 %s199, %s200
      %s202 = smul.addr %s201, 2
      %s203 = scalar_lea.vmem %s0, %s202
      %p204 = pneg %p59
      %p205 = pneg %p56
      %s206 = sadd.s32 %s21, %s22
      %p207 = scmp.lt.s32.totalorder %s20, 1
      %s208 = scalar_select %p207, %s20, 1
      %p209 = scmp.lt.s32.totalorder %s206, 0
      %s210 = scalar_select %p209, %s206, 0
      %s211 = sadd.s32 %s210, %s208
      %s212 = scalar_lea.vmem %s1, %s211
      %p213 = pneg %p89
      %p214 = pneg %p86
      %p215 = pneg %p117
      %p216 = pneg %p114
      %p217 = scmp.lt.s32.totalorder %s20, 1
      %s218 = scalar_select %p217, %s20, 1
      %p219 = scmp.lt.s32.totalorder %s21, 0
      %s220 = scalar_select %p219, %s21, 0
      %s221 = sadd.s32 %s220, %s218
      %s222 = smul.addr %s221, 4
      %s223 = scalar_lea.vmem %s2, %s222
      %p224 = pneg %p145
      %p225 = pneg %p142
      %p226 = scmp.lt.s32.totalorder %s20, 1
      %s227 = scalar_select %p226, %s20, 1
      %p228 = scmp.lt.s32.totalorder %s21, 0
      %s229 = scalar_select %p228, %s21, 0
      %s230 = sadd.s32 %s229, %s227
      %s231 = smul.addr %s230, 4
      %s232 = scalar_lea.vmem %s3, %s231
      %s233 = sadd.s32 %s21, %s22
      %p234 = scmp.lt.s32.totalorder %s20, 1
      %s235 = scalar_select %p234, %s20, 1
      %p236 = scmp.lt.s32.totalorder %s233, 0
      %s237 = scalar_select %p236, %s233, 0
      %s238 = smul.addr %s235, 4
      %s239 = sadd.s32 %s237, %s238
      %s240 = smul.addr %s239, 2
      %s241 = scalar_lea.vmem %s0, %s240
      %s242 = sadd.s32 %s21, %s22
      %s243 = sadd.s32 %s21, %s22
      %p244 = scmp.lt.s32.totalorder %s20, 1
      %s245 = scalar_select %p244, %s20, 1
      %p246 = scmp.lt.s32.totalorder %s243, 0
      %s247 = scalar_select %p246, %s243, 0
      %s248 = sadd.s32 %s247, %s245
      %s249 = scalar_lea.vmem %s1, %s248
      %s250 = sadd.s32 %s21, %s22
      %p251 = scmp.lt.s32.totalorder %s20, 1
      %s252 = scalar_select %p251, %s20, 1
      %p253 = scmp.lt.s32.totalorder %s21, 0
      %s254 = scalar_select %p253, %s21, 0
      %s255 = sadd.s32 %s254, %s252
      %s256 = smul.addr %s255, 4
      %s257 = scalar_lea.vmem %s2, %s256
      %p258 = scmp.lt.s32.totalorder %s20, 1
      %s259 = scalar_select %p258, %s20, 1
      %p260 = scmp.lt.s32.totalorder %s21, 0
      %s261 = scalar_select %p260, %s21, 0
      %s262 = sadd.s32 %s261, %s259
      %s263 = smul.addr %s262, 4
      %s264 = scalar_lea.vmem %s3, %s263
      %p265 = scmp.eq.s32.totalorder %s22, 0
      // Predicated region
      $region29: #{dice_loss_pallas.1} parent=27 // pred_check
        %p266 = pneg %p265
      $region30: #{dice_loss_pallas.1} parent=27 // pred_check_branch
        %268 = sbr.rel (%p266) target = $region32
      $region31: #{dice_loss_pallas.1} parent=27 // pred_region
        %269 = vst [vmem:[#allocation2] sm:$0x3] 0.0
        %270 = vst [vmem:[#allocation2 + $0x2] sm:$0x3] 0.0
        %271 = vst [vmem:[#allocation2 + $0x4] sm:$0x3] 0.0
        %272 = vst [vmem:[#allocation2 + $0x6] sm:$0x3] 0.0
        %273 = vst [vmem:[#allocation3] sm:$0x3] 0.0
        %274 = vst [vmem:[#allocation3 + $0x2] sm:$0x3] 0.0
        %275 = vst [vmem:[#allocation3 + $0x4] sm:$0x3] 0.0
        %276 = vst [vmem:[#allocation3 + $0x6] sm:$0x3] 0.0
      $region32: #{dice_loss_pallas.1} parent=27 // pred_fallthru
        _
      %v277 = vld [vmem:[%s241] sm:$0x3]
      %v278 = vld [vmem:[%s241 + $0x2] sm:$0x3]
      %v279 = vld [vmem:[%s241 + $0x4] sm:$0x3]
      %v280 = vld [vmem:[%s241 + $0x6] sm:$0x3]
      %v281 = vld [vmem:[%s249] sm:$0x1]
      %v282 = vunpack.c.0.s8 %v281
      %vm283 = vcmask 1041408
      %v284 = vsel %vm283, %v277, -inf
      %v285 = vsel %vm283, %v278, -inf
      %v286 = vsel %vm283, %v279, -inf
      %v287 = vsel %vm283, %v280, -inf
      %v288 = vmax.f32 %v284, %v285
      %v289 = vmax.f32 %v286, %v287
      %v290 = vmax.f32 %v288, %v289
      %v291 = vsub.f32 %v277, %v290
      %v292 = vsub.f32 %v278, %v290
      %v293 = vsub.f32 %v279, %v290
      %v294 = vsub.f32 %v280, %v290
      %v295 = vmul.f32 %v291, 1.442695
      %v296 = vpow.pop %v295
      %v297 = vmul.f32 %v292, 1.442695
      %v298 = vpow.pop %v297
      %v299 = vmul.f32 %v293, 1.442695
      %v300 = vpow.pop %v299
      %v301 = vmul.f32 %v294, 1.442695
      %v302 = vpow.pop %v301
      %v303 = vsel %vm283, %v296, 0.0
      %v304 = vsel %vm283, %v298, 0.0
      %v305 = vadd.f32 %v303, %v304
      %v306 = vsel %vm283, %v300, 0.0
      %v307 = vadd.f32 %v305, %v306
      %v308 = vsel %vm283, %v302, 0.0
      %v309 = vadd.f32 %v307, %v308
      %v310 = vrcp.pop %v309
      %v311 = vmul.f32 %v309, %v310
      %v312 = vsub.f32 2.0, %v311
      %v313 = vmul.f32 %v310, %v312
      %v314 = vmul.f32 %v296, %v313
      %v315 = vmul.f32 %v298, %v313
      %v316 = vmul.f32 %v300, %v313
      %v317 = vmul.f32 %v302, %v313
      %vm318 = vcmp.eq.s32.totalorder %v282, 0
      %vm319 = vcmp.eq.s32.totalorder %v282, 1
      %vm320 = vcmp.eq.s32.totalorder %v282, 2
      %vm321 = vcmp.eq.s32.totalorder %v282, 3
      %v322 = vld [vmem:[#allocation2] sm:$0x3]
      %v323 = vld [vmem:[#allocation2 + $0x2] sm:$0x3]
      %v324 = vld [vmem:[#allocation2 + $0x4] sm:$0x3]
      %v325 = vld [vmem:[#allocation2 + $0x6] sm:$0x3]
      %v326 = vsel %vm318, %v314, 0.0
      %v327 = vsel %vm319, %v315, 0.0
      %v328 = vsel %vm320, %v316, 0.0
      %v329 = vsel %vm321, %v317, 0.0
      %v330 = vadd.f32 %v322, %v326
      %v331 = vadd.f32 %v323, %v327
      %v332 = vadd.f32 %v324, %v328
      %v333 = vadd.f32 %v325, %v329
      %334 = vst [vmem:[#allocation2] sm:$0x3] %v330
      %335 = vst [vmem:[#allocation2 + $0x2] sm:$0x3] %v331
      %336 = vst [vmem:[#allocation2 + $0x4] sm:$0x3] %v332
      %337 = vst [vmem:[#allocation2 + $0x6] sm:$0x3] %v333
      %v338 = vld [vmem:[#allocation3] sm:$0x3]
      %v339 = vld [vmem:[#allocation3 + $0x2] sm:$0x3]
      %v340 = vld [vmem:[#allocation3 + $0x4] sm:$0x3]
      %v341 = vld [vmem:[#allocation3 + $0x6] sm:$0x3]
      %v342 = vadd.f32 %v338, %v314
      %v343 = vadd.f32 %v339, %v315
      %v344 = vadd.f32 %v340, %v316
      %v345 = vadd.f32 %v341, %v317
      %346 = vst [vmem:[#allocation3] sm:$0x3] %v342
      %347 = vst [vmem:[#allocation3 + $0x2] sm:$0x3] %v343
      %348 = vst [vmem:[#allocation3 + $0x4] sm:$0x3] %v344
      %349 = vst [vmem:[#allocation3 + $0x6] sm:$0x3] %v345
      // Predicated region
      $region33: #{dice_loss_pallas.1} parent=27 // pred_check
        %p350 = pneg %p265
      $region34: #{dice_loss_pallas.1} parent=27 // pred_check_branch
        %352 = sbr.rel (%p350) target = $region36
      $region35: #{dice_loss_pallas.1} parent=27 // pred_region
        %v353 = vld [vmem:[#allocation2] sm:$0x3]
        %v354 = vld [vmem:[#allocation2 + $0x2] sm:$0x3]
        %v355 = vld [vmem:[#allocation2 + $0x4] sm:$0x3]
        %v356 = vld [vmem:[#allocation2 + $0x6] sm:$0x3]
        %v357 = vsel %vm283, %v353, 0.0
        %v358 = vrot.slane %v357, 4
        %v359 = vadd.f32 %v357, %v358
        %v360 = vrot.slane %v359, 2
        %v361 = vadd.f32 %v359, %v360
        %v362 = vrot.slane %v361, 1
        %v363 = vadd.f32 %v361, %v362
        %v364 = vsel %vm283, %v354, 0.0
        %v365 = vrot.slane %v364, 4
        %v366 = vadd.f32 %v364, %v365
        %v367 = vrot.slane %v366, 2
        %v368 = vadd.f32 %v366, %v367
        %v369 = vrot.slane %v368, 1
        %v370 = vadd.f32 %v368, %v369
        %v371 = vsel %vm283, %v355, 0.0
        %v372 = vrot.slane %v371, 4
        %v373 = vadd.f32 %v371, %v372
        %v374 = vrot.slane %v373, 2
        %v375 = vadd.f32 %v373, %v374
        %v376 = vrot.slane %v375, 1
        %v377 = vadd.f32 %v375, %v376
        %v378 = vsel %vm283, %v356, 0.0
        %v379 = vrot.slane %v378, 4
        %v380 = vadd.f32 %v378, %v379
        %v381 = vrot.slane %v380, 2
        %v382 = vadd.f32 %v380, %v381
        %v383 = vrot.slane %v382, 1
        %v384 = vadd.f32 %v382, %v383
        %vm389 = vcmask 1041409
        %v390 = vsel %vm389, %v370, %v363
        %vm391 = vcmask 1042434
        %v392 = vsel %vm391, %v377, %v390
        %vm393 = vcmask 1043459
        %v394 = vsel %vm393, %v384, %v392
        %vm396 = vcmask 1043456
        %v397 = vsel %vm396, %v394, 0.0
        %398 = vadd.xlane.f32.xlu0 %v397
        %v399 = vpop.xlane.xlu0 %398
        %v400 = vld [vmem:[#allocation3] sm:$0x3]
        %v401 = vld [vmem:[#allocation3 + $0x2] sm:$0x3]
        %v402 = vld [vmem:[#allocation3 + $0x4] sm:$0x3]
        %v403 = vld [vmem:[#allocation3 + $0x6] sm:$0x3]
        %v404 = vsel %vm283, %v400, 0.0
        %v405 = vrot.slane %v404, 4
        %v406 = vadd.f32 %v404, %v405
        %v407 = vrot.slane %v406, 2
        %v408 = vadd.f32 %v406, %v407
        %v409 = vrot.slane %v408, 1
        %v410 = vadd.f32 %v408, %v409
        %v411 = vsel %vm283, %v401, 0.0
        %v412 = vrot.slane %v411, 4
        %v413 = vadd.f32 %v411, %v412
        %v414 = vrot.slane %v413, 2
        %v415 = vadd.f32 %v413, %v414
        %v416 = vrot.slane %v415, 1
        %v417 = vadd.f32 %v415, %v416
        %v418 = vsel %vm283, %v402, 0.0
        %v419 = vrot.slane %v418, 4
        %v420 = vadd.f32 %v418, %v419
        %v421 = vrot.slane %v420, 2
        %v422 = vadd.f32 %v420, %v421
        %v423 = vrot.slane %v422, 1
        %v424 = vadd.f32 %v422, %v423
        %v425 = vsel %vm283, %v403, 0.0
        %v426 = vrot.slane %v425, 4
        %v427 = vadd.f32 %v425, %v426
        %v428 = vrot.slane %v427, 2
        %v429 = vadd.f32 %v427, %v428
        %v430 = vrot.slane %v429, 1
        %v431 = vadd.f32 %v429, %v430
        %v436 = vsel %vm389, %v417, %v410
        %v437 = vsel %vm391, %v424, %v436
        %v438 = vsel %vm393, %v431, %v437
        %v440 = vsel %vm396, %v438, 0.0
        %441 = vadd.xlane.f32.xlu0 %v440
        %v442 = vpop.xlane.xlu0 %441
        %vm443 = vcmask 3072
        %444 = vst.msk [vmem:[%s257] sm:$0xf] %vm443, %v399
        %445 = vst.msk [vmem:[%s264] sm:$0xf] %vm443, %v442
      $region36: #{dice_loss_pallas.1} parent=27 // pred_fallthru
        _
      %p446 = scmp.lt.s32.totalorder %s20, 1
      %s447 = scalar_select %p446, %s20, 1
      %p448 = scmp.lt.s32.totalorder %s21, 0
      %s449 = scalar_select %p448, %s21, 0
      %s450 = sadd.s32 %s449, %s447
      %s451 = smul.addr %s450, 4
      %s452 = scalar_lea.vmem %s2, %s451
      %p453 = scmp.lt.s32.totalorder %s20, 1
      %s454 = scalar_select %p453, %s20, 1
      %p455 = scmp.lt.s32.totalorder %s21, 0
      %s456 = scalar_select %p455, %s21, 0
      %s457 = sadd.s32 %s456, %s454
      %s458 = smul.addr %s457, 4
      %s459 = scalar_lea.vmem %s3, %s458
      // Predicated region
      $region37: #{dice_loss_pallas.1} parent=27 // pred_check
        %p460 = pneg %p114
      $region38: #{dice_loss_pallas.1} parent=27 // pred_check_branch
        %462 = sbr.rel (%p460) target = $region40
      $region39: #{dice_loss_pallas.1} parent=27 // pred_region
        _
      $region40: #{dice_loss_pallas.1} parent=27 // pred_fallthru
        _
      // Predicated region
      $region41: #{dice_loss_pallas.1} parent=27 // pred_check
        %p463 = pneg %p142
      $region42: #{dice_loss_pallas.1} parent=27 // pred_check_branch
        %465 = sbr.rel (%p463) target = $region44
      $region43: #{dice_loss_pallas.1} parent=27 // pred_region
        _
      $region44: #{dice_loss_pallas.1} parent=27 // pred_fallthru
        _
    $region28: #{dice_loss_pallas.1} parent=5 // pred_fallthru
      _
    %p466 = scmp.le.s32.totalorder 2, %s10
    // Predicated region
    $region45: #{dice_loss_pallas.1} parent=5 // pred_check
      %p467 = pneg %p466
    $region46: #{dice_loss_pallas.1} parent=5 // pred_check_branch
      %469 = sbr.rel (%p467) target = $region48
    $region47: #{dice_loss_pallas.1} parent=5 // pred_region
      %s470 = ssub.s32 %s10, 2
      // Predicated region
      $region49: #{dice_loss_pallas.1} parent=47 // pred_check
        %p471 = pneg %p120
      $region50: #{dice_loss_pallas.1} parent=47 // pred_check_branch
        %473 = sbr.rel (%p471) target = $region52
      $region51: #{dice_loss_pallas.1} parent=47 // pred_region
        %p474 = scmp.lt.s32.totalorder %s23, 1
        %s475 = scalar_select %p474, %s23, 1
        %p476 = scmp.lt.s32.totalorder %s24, 0
        %s477 = scalar_select %p476, %s24, 0
        %s478 = sadd.s32 %s477, %s475
        %s479 = smul.addr %s478, 4
        %s480 = scalar_lea.vmem %s2, %s479
      $region52: #{dice_loss_pallas.1} parent=47 // pred_fallthru
        _
      // Predicated region
      $region53: #{dice_loss_pallas.1} parent=47 // pred_check
        %p481 = pneg %p148
      $region54: #{dice_loss_pallas.1} parent=47 // pred_check_branch
        %483 = sbr.rel (%p481) target = $region56
      $region55: #{dice_loss_pallas.1} parent=47 // pred_region
        %p484 = scmp.lt.s32.totalorder %s23, 1
        %s485 = scalar_select %p484, %s23, 1
        %p486 = scmp.lt.s32.totalorder %s24, 0
        %s487 = scalar_select %p486, %s24, 0
        %s488 = sadd.s32 %s487, %s485
        %s489 = smul.addr %s488, 4
        %s490 = scalar_lea.vmem %s3, %s489
      $region56: #{dice_loss_pallas.1} parent=47 // pred_fallthru
        _
    $region48: #{dice_loss_pallas.1} parent=5 // pred_fallthru
      _
  $region6: #{dice_loss_pallas.1} parent=0 // loop_footer
    %s14 = sadd.s32 1, %s10
  $region7: #{dice_loss_pallas.1} parent=0 // loop_footer_branch
    %9 = sbr.rel target = $region3
  $region8: #{dice_loss_pallas.1} parent=0 // loop_exit
    _

</llo_original>
